<compile_context>
chip_gen: v6e
topology: v6e:2x2x1
jax: 0.10.0
libtpu: 0.0.40
codegen_flags: <defaults>
</compile_context>

<pallas_src>
import functools
import math

import jax
import jax.numpy as jnp
from jax.experimental import pallas as pl
from jax.experimental.pallas import tpu as pltpu


def _scale_mul_kernel(tab_ref, x_ref, o_ref, *, hw, k, full_scale, compute_dtype):
    """tab_ref: (TR, ktab) scale table; x_ref/o_ref: (TR, w_row)."""
    x = x_ref[...].astype(compute_dtype)
    if full_scale:
        # Table is already the fully expanded per-lane scale.
        s = tab_ref[...].astype(compute_dtype)
    else:
        tab = tab_ref[...]
        s = tab[:, 0:1].astype(compute_dtype)          # first channel of each row
        if k > 1:
            # lane j of row r belongs to local channel (rem[r] + j) // hw.
            lane = jax.lax.broadcasted_iota(jnp.int32, x.shape, 1)
            rem = tab[:, k:k + 1].astype(jnp.int32)     # (TR, 1)
            for c in range(1, k):
                thr = c * hw - rem                      # lane where channel c starts
                s = jnp.where(lane >= thr, tab[:, c:c + 1].astype(compute_dtype), s)
    o_ref[...] = (x * s).astype(o_ref.dtype)


def _needs_f32_compute():
    """True on chips without bf16 VALU (v5e and older)."""
    try:
        kind = jax.devices()[0].device_kind.lower()
    except Exception:  # pragma: no cover - defensive
        return False
    return any(t in kind for t in ("v2", "v3", "v4", "v5"))


def channel_scale_mul(x422, x417):
    """x422: (N, C, 1, 1), x417: (N, C, H, W) -> x422 * x417."""
    N, C, H, W = x417.shape
    assert x422.shape == (N, C, 1, 1)
    NC, HW = N * C, H * W
    total = NC * HW

    out_dtype = jnp.result_type(x422.dtype, x417.dtype)
    if total == 0:
        return jnp.zeros((N, C, H, W), out_dtype)

    compute_dtype = out_dtype
    if jnp.dtype(out_dtype).itemsize < 4 and _needs_f32_compute():
        compute_dtype = jnp.promote_types(out_dtype, jnp.float32)

    # ---- row layout: lane-dense (rows, 128) when it is a free reshape --------
    if total % 128 == 0:
        w_row = 128
    else:
        w_row = HW          # natural (N*C, HW) layout fallback (still correct)
    rows = total // w_row

    # Max number of distinct channels any w_row-wide row can span (rows always
    # start at multiples of w_row): exact closed form via gcd.
    g = math.gcd(w_row, HW)
    k = (HW - g + w_row - 1) // HW + 1

    scale_flat = x422.reshape(NC)
    full_scale = k > 8          # tiny-HW corner cases: pre-expand (rare, correct)
    if full_scale:
        tab = jnp.broadcast_to(
            scale_flat.astype(compute_dtype)[:, None], (NC, HW)).reshape(rows, w_row)
        ktab = w_row
    else:
        r = jnp.arange(rows, dtype=jnp.int32)
        start = r * w_row
        c_start = start // HW
        rem = start - c_start * HW
        sf32 = scale_flat.astype(jnp.float32)
        if k > 1:
            ch = jnp.clip(c_start[:, None] + jnp.arange(k, dtype=jnp.int32)[None, :],
                          0, NC - 1)
            tab = jnp.concatenate([sf32[ch], rem[:, None].astype(jnp.float32)], axis=1)
            ktab = k + 1
        else:
            tab = sf32[c_start][:, None]
            ktab = 1

    x2d = x417.reshape(rows, w_row)     # contiguous -> free reshape

    # ---- tiling: single block for small inputs, ~512-row tiles otherwise -----
    x_b = jnp.dtype(x417.dtype).itemsize
    o_b = jnp.dtype(out_dtype).itemsize
    t_b = jnp.dtype(tab.dtype).itemsize
    lane_pad = -(-w_row // 128) * 128          # VMEM lane padding of x / out tiles
    tab_pad = -(-ktab // 128) * 128

    def footprint(tr):
        # in + out + table blocks, x2 for double-buffered pipelining.
        return 2 * tr * (lane_pad * (x_b + o_b) + tab_pad * t_b)

    SINGLE_BLOCK_BUDGET = 8 << 20   # safe under every generation's scoped-VMEM default
    if footprint(rows) <= SINGLE_BLOCK_BUDGET:
        tr = rows
        num_blocks = 1
    else:
        tr = 512
        while footprint(tr) > SINGLE_BLOCK_BUDGET and tr > 8:
            tr //= 2
        num_blocks = pl.cdiv(rows, tr)

    vmem_limit = int(min(32 << 20, max(16 << 20, 4 * footprint(tr))))

    kernel = functools.partial(
        _scale_mul_kernel, hw=HW, k=k, full_scale=full_scale,
        compute_dtype=compute_dtype)

    out2d = pl.pallas_call(
        kernel,
        out_shape=jax.ShapeDtypeStruct((rows, w_row), out_dtype),
        grid=(num_blocks,),
        in_specs=[
            pl.BlockSpec((tr, ktab), lambda i: (i, 0)),    # compact scale table
            pl.BlockSpec((tr, w_row), lambda i: (i, 0)),   # activations (lane dense)
        ],
        out_specs=pl.BlockSpec((tr, w_row), lambda i: (i, 0)),
        compiler_params=pltpu.CompilerParams(
            dimension_semantics=("parallel",),
            vmem_limit_bytes=vmem_limit),
    )(tab, x2d)

    return out2d.reshape(N, C, H, W)


if __name__ == "__main__":
    key = jax.random.PRNGKey(0)
    k1, k2, k3, k4 = jax.random.split(key, 4)

    # Small shape consistent with the module (1, 1536, 7, 7) / (1, 1536, 1, 1):
    # 256 channels, 7x7 spatial -> exercises the lane-dense (rows, 128) path
    # with the 4-entry per-row scale table (same path the real shape takes).
    N, C, H, W = 1, 256, 7, 7
    x417 = jax.random.normal(k1, (N, C, H, W), dtype=jnp.float32)
    x422 = jax.random.normal(k2, (N, C, 1, 1), dtype=jnp.float32)
    out = channel_scale_mul(x422, x417)
    jax.block_until_ready(out)
    ref = x422 * x417
    assert out.shape == ref.shape and out.dtype == ref.dtype
    assert jnp.allclose(out, ref, atol=1e-6, rtol=1e-6)

    # Non-128-divisible total -> natural-layout fallback path.
    x417b = jax.random.normal(k3, (2, 12, 5, 5), dtype=jnp.float32)
    x422b = jax.random.normal(k4, (2, 12, 1, 1), dtype=jnp.float32)
    outb = channel_scale_mul(x422b, x417b)
    jax.block_until_ready(outb)
    refb = x422b * x417b
    assert jnp.allclose(outb, refb, atol=1e-6, rtol=1e-6)

    print("KERNEL_OK")
</pallas_src>

<mosaic_0001>
module attributes {stable_mosaic.version = 11 : i64} {
  func.func @_scale_mul_kernel(%arg0: i32, %arg1: memref<98x5xf32, #tpu.memory_space<vmem>>, %arg2: memref<98x128xf32, #tpu.memory_space<vmem>>, %arg3: memref<98x128xf32, #tpu.memory_space<vmem>>) attributes {dimension_semantics = [#tpu.dimension_semantics<parallel>], iteration_bounds = array<i64: 1>, scalar_prefetch = 0 : i64, scratch_operands = 0 : i64, tpu.core_type = #tpu.core_type<tc>, window_params = [{transform_indices = @transform_0, window_bounds = array<i64: 98, 5>}, {transform_indices = @transform_1, window_bounds = array<i64: 98, 128>}, {transform_indices = @transform_2, window_bounds = array<i64: 98, 128>}]} {
    %c0 = arith.constant 0 : index
    %c0_0 = arith.constant 0 : index
    %0 = vector.load %arg2[%c0, %c0_0] : memref<98x128xf32, #tpu.memory_space<vmem>>, vector<98x128xf32>
    %c0_1 = arith.constant 0 : index
    %c0_2 = arith.constant 0 : index
    %1 = vector.load %arg1[%c0_1, %c0_2] : memref<98x5xf32, #tpu.memory_space<vmem>>, vector<98x5xf32>
    %2 = vector.extract_strided_slice %1 {offsets = [0, 0], sizes = [98, 1], strides = [1, 1]} : vector<98x5xf32> to vector<98x1xf32>
    %3 = tpu.iota {dimensions = array<i32: 1>} : vector<98x128xi32>
    %4 = vector.extract_strided_slice %1 {offsets = [0, 4], sizes = [98, 1], strides = [1, 1]} : vector<98x5xf32> to vector<98x1xf32>
    %5 = arith.fptosi %4 : vector<98x1xf32> to vector<98x1xi32>
    %c49_i32 = arith.constant 49 : i32
    %6 = vector.broadcast %c49_i32 : i32 to vector<98x1xi32>
    %7 = arith.subi %6, %5 : vector<98x1xi32>
    %8 = vector.broadcast %7 : vector<98x1xi32> to vector<98x128xi32>
    %9 = arith.cmpi sge, %3, %8 : vector<98x128xi32>
    %10 = vector.extract_strided_slice %1 {offsets = [0, 1], sizes = [98, 1], strides = [1, 1]} : vector<98x5xf32> to vector<98x1xf32>
    %11 = vector.shape_cast %10 : vector<98x1xf32> to vector<98x1xf32>
    %12 = vector.broadcast %11 : vector<98x1xf32> to vector<98x128xf32>
    %13 = vector.shape_cast %2 : vector<98x1xf32> to vector<98x1xf32>
    %14 = vector.broadcast %13 : vector<98x1xf32> to vector<98x128xf32>
    %15 = arith.select %9, %12, %14 : vector<98x128xi1>, vector<98x128xf32>
    %c98_i32 = arith.constant 98 : i32
    %16 = vector.broadcast %c98_i32 : i32 to vector<98x1xi32>
    %17 = arith.subi %16, %5 : vector<98x1xi32>
    %18 = vector.broadcast %17 : vector<98x1xi32> to vector<98x128xi32>
    %19 = arith.cmpi sge, %3, %18 : vector<98x128xi32>
    %20 = vector.extract_strided_slice %1 {offsets = [0, 2], sizes = [98, 1], strides = [1, 1]} : vector<98x5xf32> to vector<98x1xf32>
    %21 = vector.shape_cast %20 : vector<98x1xf32> to vector<98x1xf32>
    %22 = vector.broadcast %21 : vector<98x1xf32> to vector<98x128xf32>
    %23 = arith.select %19, %22, %15 : vector<98x128xi1>, vector<98x128xf32>
    %c147_i32 = arith.constant 147 : i32
    %24 = vector.broadcast %c147_i32 : i32 to vector<98x1xi32>
    %25 = arith.subi %24, %5 : vector<98x1xi32>
    %26 = vector.broadcast %25 : vector<98x1xi32> to vector<98x128xi32>
    %27 = arith.cmpi sge, %3, %26 : vector<98x128xi32>
    %28 = vector.extract_strided_slice %1 {offsets = [0, 3], sizes = [98, 1], strides = [1, 1]} : vector<98x5xf32> to vector<98x1xf32>
    %29 = vector.shape_cast %28 : vector<98x1xf32> to vector<98x1xf32>
    %30 = vector.broadcast %29 : vector<98x1xf32> to vector<98x128xf32>
    %31 = arith.select %27, %30, %23 : vector<98x128xi1>, vector<98x128xf32>
    %32 = arith.mulf %0, %31 : vector<98x128xf32>
    %c0_3 = arith.constant 0 : index
    %c0_4 = arith.constant 0 : index
    %33 = vector.load %arg3[%c0_3, %c0_4] : memref<98x128xf32, #tpu.memory_space<vmem>>, vector<98x128xf32>
    tpu.vector_store %arg3[%c0_3, %c0_4], %32 {strides = array<i32>} : memref<98x128xf32, #tpu.memory_space<vmem>>, vector<98x128xf32>,
    return
  }
  func.func @transform_0(%arg0: i32) -> (i32, i32) {
    %c0_i32 = arith.constant 0 : i32
    %c0_i32_0 = arith.constant 0 : i32
    return %arg0, %c0_i32 : i32, i32
  }
  func.func @transform_1(%arg0: i32) -> (i32, i32) {
    %c0_i32 = arith.constant 0 : i32
    %c0_i32_0 = arith.constant 0 : i32
    return %arg0, %c0_i32 : i32, i32
  }
  func.func @transform_2(%arg0: i32) -> (i32, i32) {
    %c0_i32 = arith.constant 0 : i32
    %c0_i32_0 = arith.constant 0 : i32
    return %arg0, %c0_i32 : i32, i32
  }
}

</mosaic_0001>

<llo_original>
// kernel: tpu_custom_call.1
$region0: #{tpu_custom_call.1}
  #allocation0 [shape = 'u32[]', space=smem, size = 0x4, offset = 0x4, fixed_abs, tag = 'smem constant byte address 0x4 - core index']
  #allocation1 [shape = 'u32[144,128]{1,0:T(1,128)}', space=vmem, size = 0x12000, scoped, tag = 'internal scratch']
  %s0 = inlined_call_operand.vmem [shape: f32[98,5], index: 0, kind: input, shape index: {}]
  %s1 = inlined_call_operand.vmem [shape: f32[98,128], index: 1, kind: input, shape index: {}]
  %s2 = inlined_call_operand.hbm [shape: f32[98,128], index: 2, kind: output, shape index: {}]
  %s3 = sld [smem:[#allocation0]]
  $region18: #{tpu_custom_call.1} parent=0
    _
  %s5 = ssub.s32 1, %s3
  %s6 = scalar_select 0, %s5, %s3
  $region1: #{tpu_custom_call.1} parent=0
    #allocation2 [shape = 'u8[53248]{0}', space=vmem, size = 0xd000, scoped, tag = 'output window, operand 0, single buffered']
    #allocation3 [shape = 's32[1]{0}', space=sflag, size = 0x4, scoped, tag = 'scoped memory for tpu_custom_call.1']
    %7 = vsyncpa [#allocation3], 0
    // Predicated region
    $region2: #{tpu_custom_call.1} parent=1 // pred_check
      _
    $region3: #{tpu_custom_call.1} parent=1 // pred_check_branch
      %9 = sbr.rel (0) target = $region5
    $region4: #{tpu_custom_call.1} parent=1 // pred_region
      _
    $region5: #{tpu_custom_call.1} parent=1 // pred_fallthru
      _
    // Predicated region
    $region6: #{tpu_custom_call.1} parent=1 // pred_check
      _
    $region7: #{tpu_custom_call.1} parent=1 // pred_check_branch
      %11 = sbr.rel (0) target = $region9
    $region8: #{tpu_custom_call.1} parent=1 // pred_region
      _
    $region9: #{tpu_custom_call.1} parent=1 // pred_fallthru
      _
    %v12 = vld [vmem:[%s1] sm:$0xff]
    %v13 = vld [vmem:[%s1 + $0x8] sm:$0xff]
    %v14 = vld [vmem:[%s1 + $0x10] sm:$0xff]
    %v15 = vld [vmem:[%s1 + $0x18] sm:$0xff]
    %v16 = vld [vmem:[%s1 + $0x20] sm:$0xff]
    %v17 = vld [vmem:[%s1 + $0x28] sm:$0xff]
    %v18 = vld [vmem:[%s1 + $0x30] sm:$0xff]
    %v19 = vld [vmem:[%s1 + $0x38] sm:$0xff]
    %v20 = vld [vmem:[%s1 + $0x40] sm:$0xff]
    %v21 = vld [vmem:[%s1 + $0x48] sm:$0xff]
    %v22 = vld [vmem:[%s1 + $0x50] sm:$0xff]
    %v23 = vld [vmem:[%s1 + $0x58] sm:$0xff]
    %v24 = vld [vmem:[%s1 + $0x60] sm:$0x3]
    %v25 = vld [vmem:[%s0] sm:$0xff]
    %v26 = vld [vmem:[%s0 + $0x8] sm:$0xff]
    %v27 = vld [vmem:[%s0 + $0x10] sm:$0xff]
    %v28 = vld [vmem:[%s0 + $0x18] sm:$0xff]
    %v29 = vld [vmem:[%s0 + $0x20] sm:$0xff]
    %v30 = vld [vmem:[%s0 + $0x28] sm:$0xff]
    %v31 = vld [vmem:[%s0 + $0x30] sm:$0xff]
    %v32 = vld [vmem:[%s0 + $0x38] sm:$0xff]
    %v33 = vld [vmem:[%s0 + $0x40] sm:$0xff]
    %v34 = vld [vmem:[%s0 + $0x48] sm:$0xff]
    %v35 = vld [vmem:[%s0 + $0x50] sm:$0xff]
    %v36 = vld [vmem:[%s0 + $0x58] sm:$0xff]
    %v37 = vld [vmem:[%s0 + $0x60] sm:$0x3]
    %v38 = vlaneseq
    %v39 = vand.u32 %v38, 127
    %v40 = vcvt.f32.s32.to.zero.pseudo %v25
    %v41 = vcvt.f32.s32.to.zero.pseudo %v26
    %v42 = vcvt.f32.s32.to.zero.pseudo %v27
    %v43 = vcvt.f32.s32.to.zero.pseudo %v28
    %v44 = vcvt.f32.s32.to.zero.pseudo %v29
    %v45 = vcvt.f32.s32.to.zero.pseudo %v30
    %v46 = vcvt.f32.s32.to.zero.pseudo %v31
    %v47 = vcvt.f32.s32.to.zero.pseudo %v32
    %v48 = vcvt.f32.s32.to.zero.pseudo %v33
    %v49 = vcvt.f32.s32.to.zero.pseudo %v34
    %v50 = vcvt.f32.s32.to.zero.pseudo %v35
    %v51 = vcvt.f32.s32.to.zero.pseudo %v36
    %v52 = vcvt.f32.s32.to.zero.pseudo %v37
    %v53 = vsub.s32 49, %v40
    %v54 = vsub.s32 49, %v41
    %v55 = vsub.s32 49, %v42
    %v56 = vsub.s32 49, %v43
    %v57 = vsub.s32 49, %v44
    %v58 = vsub.s32 49, %v45
    %v59 = vsub.s32 49, %v46
    %v60 = vsub.s32 49, %v47
    %v61 = vsub.s32 49, %v48
    %v62 = vsub.s32 49, %v49
    %v63 = vsub.s32 49, %v50
    %v64 = vsub.s32 49, %v51
    %v65 = vsub.s32 49, %v52
    %66 = vset.pattern.permute.xlu0 4
    %67 = vperm.xlu0 %66, %v53
    %v68 = vpop.permute.xlu0 %67
    %69 = vset.pattern.permute.xlu0 4
    %70 = vperm.xlu0 %69, %v54
    %v71 = vpop.permute.xlu0 %70
    %72 = vset.pattern.permute.xlu0 4
    %73 = vperm.xlu0 %72, %v55
    %v74 = vpop.permute.xlu0 %73
    %75 = vset.pattern.permute.xlu0 4
    %76 = vperm.xlu0 %75, %v56
    %v77 = vpop.permute.xlu0 %76
    %78 = vset.pattern.permute.xlu0 4
    %79 = vperm.xlu0 %78, %v57
    %v80 = vpop.permute.xlu0 %79
    %81 = vset.pattern.permute.xlu0 4
    %82 = vperm.xlu0 %81, %v58
    %v83 = vpop.permute.xlu0 %82
    %84 = vset.pattern.permute.xlu0 4
    %85 = vperm.xlu0 %84, %v59
    %v86 = vpop.permute.xlu0 %85
    %87 = vset.pattern.permute.xlu0 4
    %88 = vperm.xlu0 %87, %v60
    %v89 = vpop.permute.xlu0 %88
    %90 = vset.pattern.permute.xlu0 4
    %91 = vperm.xlu0 %90, %v61
    %v92 = vpop.permute.xlu0 %91
    %93 = vset.pattern.permute.xlu0 4
    %94 = vperm.xlu0 %93, %v62
    %v95 = vpop.permute.xlu0 %94
    %96 = vset.pattern.permute.xlu0 4
    %97 = vperm.xlu0 %96, %v63
    %v98 = vpop.permute.xlu0 %97
    %99 = vset.pattern.permute.xlu0 4
    %100 = vperm.xlu0 %99, %v64
    %v101 = vpop.permute.xlu0 %100
    %102 = vset.pattern.permute.xlu0 4
    %103 = vperm.xlu0 %102, %v65
    %v104 = vpop.permute.xlu0 %103
    %vm105 = vcmp.ge.s32.totalorder %v39, %v68
    %vm106 = vcmp.ge.s32.totalorder %v39, %v71
    %vm107 = vcmp.ge.s32.totalorder %v39, %v74
    %vm108 = vcmp.ge.s32.totalorder %v39, %v77
    %vm109 = vcmp.ge.s32.totalorder %v39, %v80
    %vm110 = vcmp.ge.s32.totalorder %v39, %v83
    %vm111 = vcmp.ge.s32.totalorder %v39, %v86
    %vm112 = vcmp.ge.s32.totalorder %v39, %v89
    %vm113 = vcmp.ge.s32.totalorder %v39, %v92
    %vm114 = vcmp.ge.s32.totalorder %v39, %v95
    %vm115 = vcmp.ge.s32.totalorder %v39, %v98
    %vm116 = vcmp.ge.s32.totalorder %v39, %v101
    %vm117 = vcmp.ge.s32.totalorder %v39, %v104
    %119 = vset.pattern.permute.xlu0 1
    %120 = vperm.xlu0 %119, %v25
    %v121 = vpop.permute.xlu0 %120
    %124 = vset.pattern.permute.xlu0 1
    %125 = vperm.xlu0 %124, %v26
    %v126 = vpop.permute.xlu0 %125
    %129 = vset.pattern.permute.xlu0 1
    %130 = vperm.xlu0 %129, %v27
    %v131 = vpop.permute.xlu0 %130
    %134 = vset.pattern.permute.xlu0 1
    %135 = vperm.xlu0 %134, %v28
    %v136 = vpop.permute.xlu0 %135
    %139 = vset.pattern.permute.xlu0 1
    %140 = vperm.xlu0 %139, %v29
    %v141 = vpop.permute.xlu0 %140
    %144 = vset.pattern.permute.xlu0 1
    %145 = vperm.xlu0 %144, %v30
    %v146 = vpop.permute.xlu0 %145
    %149 = vset.pattern.permute.xlu0 1
    %150 = vperm.xlu0 %149, %v31
    %v151 = vpop.permute.xlu0 %150
    %154 = vset.pattern.permute.xlu0 1
    %155 = vperm.xlu0 %154, %v32
    %v156 = vpop.permute.xlu0 %155
    %159 = vset.pattern.permute.xlu0 1
    %160 = vperm.xlu0 %159, %v33
    %v161 = vpop.permute.xlu0 %160
    %164 = vset.pattern.permute.xlu0 1
    %165 = vperm.xlu0 %164, %v34
    %v166 = vpop.permute.xlu0 %165
    %169 = vset.pattern.permute.xlu0 1
    %170 = vperm.xlu0 %169, %v35
    %v171 = vpop.permute.xlu0 %170
    %174 = vset.pattern.permute.xlu0 1
    %175 = vperm.xlu0 %174, %v36
    %v176 = vpop.permute.xlu0 %175
    %179 = vset.pattern.permute.xlu0 1
    %180 = vperm.xlu0 %179, %v37
    %v181 = vpop.permute.xlu0 %180
    %183 = vset.pattern.permute.xlu0 0
    %184 = vperm.xlu0 %183, %v25
    %v185 = vpop.permute.xlu0 %184
    %187 = vset.pattern.permute.xlu0 0
    %188 = vperm.xlu0 %187, %v26
    %v189 = vpop.permute.xlu0 %188
    %191 = vset.pattern.permute.xlu0 0
    %192 = vperm.xlu0 %191, %v27
    %v193 = vpop.permute.xlu0 %192
    %195 = vset.pattern.permute.xlu0 0
    %196 = vperm.xlu0 %195, %v28
    %v197 = vpop.permute.xlu0 %196
    %199 = vset.pattern.permute.xlu0 0
    %200 = vperm.xlu0 %199, %v29
    %v201 = vpop.permute.xlu0 %200
    %203 = vset.pattern.permute.xlu0 0
    %204 = vperm.xlu0 %203, %v30
    %v205 = vpop.permute.xlu0 %204
    %207 = vset.pattern.permute.xlu0 0
    %208 = vperm.xlu0 %207, %v31
    %v209 = vpop.permute.xlu0 %208
    %211 = vset.pattern.permute.xlu0 0
    %212 = vperm.xlu0 %211, %v32
    %v213 = vpop.permute.xlu0 %212
    %215 = vset.pattern.permute.xlu0 0
    %216 = vperm.xlu0 %215, %v33
    %v217 = vpop.permute.xlu0 %216
    %219 = vset.pattern.permute.xlu0 0
    %220 = vperm.xlu0 %219, %v34
    %v221 = vpop.permute.xlu0 %220
    %223 = vset.pattern.permute.xlu0 0
    %224 = vperm.xlu0 %223, %v35
    %v225 = vpop.permute.xlu0 %224
    %227 = vset.pattern.permute.xlu0 0
    %228 = vperm.xlu0 %227, %v36
    %v229 = vpop.permute.xlu0 %228
    %231 = vset.pattern.permute.xlu0 0
    %232 = vperm.xlu0 %231, %v37
    %v233 = vpop.permute.xlu0 %232
    %v235 = vsel %vm105, %v121, %v185
    %v236 = vsel %vm106, %v126, %v189
    %v237 = vsel %vm107, %v131, %v193
    %v238 = vsel %vm108, %v136, %v197
    %v239 = vsel %vm109, %v141, %v201
    %v240 = vsel %vm110, %v146, %v205
    %v241 = vsel %vm111, %v151, %v209
    %v242 = vsel %vm112, %v156, %v213
    %v243 = vsel %vm113, %v161, %v217
    %v244 = vsel %vm114, %v166, %v221
    %v245 = vsel %vm115, %v171, %v225
    %v246 = vsel %vm116, %v176, %v229
    %v247 = vsel %vm117, %v181, %v233
    %v248 = vsub.s32 98, %v40
    %v249 = vsub.s32 98, %v41
    %v250 = vsub.s32 98, %v42
    %v251 = vsub.s32 98, %v43
    %v252 = vsub.s32 98, %v44
    %v253 = vsub.s32 98, %v45
    %v254 = vsub.s32 98, %v46
    %v255 = vsub.s32 98, %v47
    %v256 = vsub.s32 98, %v48
    %v257 = vsub.s32 98, %v49
    %v258 = vsub.s32 98, %v50
    %v259 = vsub.s32 98, %v51
    %v260 = vsub.s32 98, %v52
    %261 = vset.pattern.permute.xlu0 4
    %262 = vperm.xlu0 %261, %v248
    %v263 = vpop.permute.xlu0 %262
    %264 = vset.pattern.permute.xlu0 4
    %265 = vperm.xlu0 %264, %v249
    %v266 = vpop.permute.xlu0 %265
    %267 = vset.pattern.permute.xlu0 4
    %268 = vperm.xlu0 %267, %v250
    %v269 = vpop.permute.xlu0 %268
    %270 = vset.pattern.permute.xlu0 4
    %271 = vperm.xlu0 %270, %v251
    %v272 = vpop.permute.xlu0 %271
    %273 = vset.pattern.permute.xlu0 4
    %274 = vperm.xlu0 %273, %v252
    %v275 = vpop.permute.xlu0 %274
    %276 = vset.pattern.permute.xlu0 4
    %277 = vperm.xlu0 %276, %v253
    %v278 = vpop.permute.xlu0 %277
    %279 = vset.pattern.permute.xlu0 4
    %280 = vperm.xlu0 %279, %v254
    %v281 = vpop.permute.xlu0 %280
    %282 = vset.pattern.permute.xlu0 4
    %283 = vperm.xlu0 %282, %v255
    %v284 = vpop.permute.xlu0 %283
    %285 = vset.pattern.permute.xlu0 4
    %286 = vperm.xlu0 %285, %v256
    %v287 = vpop.permute.xlu0 %286
    %288 = vset.pattern.permute.xlu0 4
    %289 = vperm.xlu0 %288, %v257
    %v290 = vpop.permute.xlu0 %289
    %291 = vset.pattern.permute.xlu0 4
    %292 = vperm.xlu0 %291, %v258
    %v293 = vpop.permute.xlu0 %292
    %294 = vset.pattern.permute.xlu0 4
    %295 = vperm.xlu0 %294, %v259
    %v296 = vpop.permute.xlu0 %295
    %297 = vset.pattern.permute.xlu0 4
    %298 = vperm.xlu0 %297, %v260
    %v299 = vpop.permute.xlu0 %298
    %vm300 = vcmp.ge.s32.totalorder %v39, %v263
    %vm301 = vcmp.ge.s32.totalorder %v39, %v266
    %vm302 = vcmp.ge.s32.totalorder %v39, %v269
    %vm303 = vcmp.ge.s32.totalorder %v39, %v272
    %vm304 = vcmp.ge.s32.totalorder %v39, %v275
    %vm305 = vcmp.ge.s32.totalorder %v39, %v278
    %vm306 = vcmp.ge.s32.totalorder %v39, %v281
    %vm307 = vcmp.ge.s32.totalorder %v39, %v284
    %vm308 = vcmp.ge.s32.totalorder %v39, %v287
    %vm309 = vcmp.ge.s32.totalorder %v39, %v290
    %vm310 = vcmp.ge.s32.totalorder %v39, %v293
    %vm311 = vcmp.ge.s32.totalorder %v39, %v296
    %vm312 = vcmp.ge.s32.totalorder %v39, %v299
    %313 = vset.pattern.permute.xlu0 2
    %314 = vperm.xlu0 %313, %v25
    %v315 = vpop.permute.xlu0 %314
    %317 = vset.pattern.permute.xlu0 2
    %318 = vperm.xlu0 %317, %v26
    %v319 = vpop.permute.xlu0 %318
    %321 = vset.pattern.permute.xlu0 2
    %322 = vperm.xlu0 %321, %v27
    %v323 = vpop.permute.xlu0 %322
    %325 = vset.pattern.permute.xlu0 2
    %326 = vperm.xlu0 %325, %v28
    %v327 = vpop.permute.xlu0 %326
    %329 = vset.pattern.permute.xlu0 2
    %330 = vperm.xlu0 %329, %v29
    %v331 = vpop.permute.xlu0 %330
    %333 = vset.pattern.permute.xlu0 2
    %334 = vperm.xlu0 %333, %v30
    %v335 = vpop.permute.xlu0 %334
    %337 = vset.pattern.permute.xlu0 2
    %338 = vperm.xlu0 %337, %v31
    %v339 = vpop.permute.xlu0 %338
    %341 = vset.pattern.permute.xlu0 2
    %342 = vperm.xlu0 %341, %v32
    %v343 = vpop.permute.xlu0 %342
    %345 = vset.pattern.permute.xlu0 2
    %346 = vperm.xlu0 %345, %v33
    %v347 = vpop.permute.xlu0 %346
    %349 = vset.pattern.permute.xlu0 2
    %350 = vperm.xlu0 %349, %v34
    %v351 = vpop.permute.xlu0 %350
    %353 = vset.pattern.permute.xlu0 2
    %354 = vperm.xlu0 %353, %v35
    %v355 = vpop.permute.xlu0 %354
    %357 = vset.pattern.permute.xlu0 2
    %358 = vperm.xlu0 %357, %v36
    %v359 = vpop.permute.xlu0 %358
    %361 = vset.pattern.permute.xlu0 2
    %362 = vperm.xlu0 %361, %v37
    %v363 = vpop.permute.xlu0 %362
    %v365 = vsel %vm300, %v315, %v235
    %v366 = vsel %vm301, %v319, %v236
    %v367 = vsel %vm302, %v323, %v237
    %v368 = vsel %vm303, %v327, %v238
    %v369 = vsel %vm304, %v331, %v239
    %v370 = vsel %vm305, %v335, %v240
    %v371 = vsel %vm306, %v339, %v241
    %v372 = vsel %vm307, %v343, %v242
    %v373 = vsel %vm308, %v347, %v243
    %v374 = vsel %vm309, %v351, %v244
    %v375 = vsel %vm310, %v355, %v245
    %v376 = vsel %vm311, %v359, %v246
    %v377 = vsel %vm312, %v363, %v247
    %v378 = vsub.s32 147, %v40
    %v379 = vsub.s32 147, %v41
    %v380 = vsub.s32 147, %v42
    %v381 = vsub.s32 147, %v43
    %v382 = vsub.s32 147, %v44
    %v383 = vsub.s32 147, %v45
    %v384 = vsub.s32 147, %v46
    %v385 = vsub.s32 147, %v47
    %v386 = vsub.s32 147, %v48
    %v387 = vsub.s32 147, %v49
    %v388 = vsub.s32 147, %v50
    %v389 = vsub.s32 147, %v51
    %v390 = vsub.s32 147, %v52
    %391 = vset.pattern.permute.xlu0 4
    %392 = vperm.xlu0 %391, %v378
    %v393 = vpop.permute.xlu0 %392
    %394 = vset.pattern.permute.xlu0 4
    %395 = vperm.xlu0 %394, %v379
    %v396 = vpop.permute.xlu0 %395
    %397 = vset.pattern.permute.xlu0 4
    %398 = vperm.xlu0 %397, %v380
    %v399 = vpop.permute.xlu0 %398
    %400 = vset.pattern.permute.xlu0 4
    %401 = vperm.xlu0 %400, %v381
    %v402 = vpop.permute.xlu0 %401
    %403 = vset.pattern.permute.xlu0 4
    %404 = vperm.xlu0 %403, %v382
    %v405 = vpop.permute.xlu0 %404
    %406 = vset.pattern.permute.xlu0 4
    %407 = vperm.xlu0 %406, %v383
    %v408 = vpop.permute.xlu0 %407
    %409 = vset.pattern.permute.xlu0 4
    %410 = vperm.xlu0 %409, %v384
    %v411 = vpop.permute.xlu0 %410
    %412 = vset.pattern.permute.xlu0 4
    %413 = vperm.xlu0 %412, %v385
    %v414 = vpop.permute.xlu0 %413
    %415 = vset.pattern.permute.xlu0 4
    %416 = vperm.xlu0 %415, %v386
    %v417 = vpop.permute.xlu0 %416
    %418 = vset.pattern.permute.xlu0 4
    %419 = vperm.xlu0 %418, %v387
    %v420 = vpop.permute.xlu0 %419
    %421 = vset.pattern.permute.xlu0 4
    %422 = vperm.xlu0 %421, %v388
    %v423 = vpop.permute.xlu0 %422
    %424 = vset.pattern.permute.xlu0 4
    %425 = vperm.xlu0 %424, %v389
    %v426 = vpop.permute.xlu0 %425
    %427 = vset.pattern.permute.xlu0 4
    %428 = vperm.xlu0 %427, %v390
    %v429 = vpop.permute.xlu0 %428
    %vm430 = vcmp.ge.s32.totalorder %v39, %v393
    %vm431 = vcmp.ge.s32.totalorder %v39, %v396
    %vm432 = vcmp.ge.s32.totalorder %v39, %v399
    %vm433 = vcmp.ge.s32.totalorder %v39, %v402
    %vm434 = vcmp.ge.s32.totalorder %v39, %v405
    %vm435 = vcmp.ge.s32.totalorder %v39, %v408
    %vm436 = vcmp.ge.s32.totalorder %v39, %v411
    %vm437 = vcmp.ge.s32.totalorder %v39, %v414
    %vm438 = vcmp.ge.s32.totalorder %v39, %v417
    %vm439 = vcmp.ge.s32.totalorder %v39, %v420
    %vm440 = vcmp.ge.s32.totalorder %v39, %v423
    %vm441 = vcmp.ge.s32.totalorder %v39, %v426
    %vm442 = vcmp.ge.s32.totalorder %v39, %v429
    %443 = vset.pattern.permute.xlu0 3
    %444 = vperm.xlu0 %443, %v25
    %v445 = vpop.permute.xlu0 %444
    %447 = vset.pattern.permute.xlu0 3
    %448 = vperm.xlu0 %447, %v26
    %v449 = vpop.permute.xlu0 %448
    %451 = vset.pattern.permute.xlu0 3
    %452 = vperm.xlu0 %451, %v27
    %v453 = vpop.permute.xlu0 %452
    %455 = vset.pattern.permute.xlu0 3
    %456 = vperm.xlu0 %455, %v28
    %v457 = vpop.permute.xlu0 %456
    %459 = vset.pattern.permute.xlu0 3
    %460 = vperm.xlu0 %459, %v29
    %v461 = vpop.permute.xlu0 %460
    %463 = vset.pattern.permute.xlu0 3
    %464 = vperm.xlu0 %463, %v30
    %v465 = vpop.permute.xlu0 %464
    %467 = vset.pattern.permute.xlu0 3
    %468 = vperm.xlu0 %467, %v31
    %v469 = vpop.permute.xlu0 %468
    %471 = vset.pattern.permute.xlu0 3
    %472 = vperm.xlu0 %471, %v32
    %v473 = vpop.permute.xlu0 %472
    %475 = vset.pattern.permute.xlu0 3
    %476 = vperm.xlu0 %475, %v33
    %v477 = vpop.permute.xlu0 %476
    %479 = vset.pattern.permute.xlu0 3
    %480 = vperm.xlu0 %479, %v34
    %v481 = vpop.permute.xlu0 %480
    %483 = vset.pattern.permute.xlu0 3
    %484 = vperm.xlu0 %483, %v35
    %v485 = vpop.permute.xlu0 %484
    %487 = vset.pattern.permute.xlu0 3
    %488 = vperm.xlu0 %487, %v36
    %v489 = vpop.permute.xlu0 %488
    %491 = vset.pattern.permute.xlu0 3
    %492 = vperm.xlu0 %491, %v37
    %v493 = vpop.permute.xlu0 %492
    %v495 = vsel %vm430, %v445, %v365
    %v496 = vsel %vm431, %v449, %v366
    %v497 = vsel %vm432, %v453, %v367
    %v498 = vsel %vm433, %v457, %v368
    %v499 = vsel %vm434, %v461, %v369
    %v500 = vsel %vm435, %v465, %v370
    %v501 = vsel %vm436, %v469, %v371
    %v502 = vsel %vm437, %v473, %v372
    %v503 = vsel %vm438, %v477, %v373
    %v504 = vsel %vm439, %v481, %v374
    %v505 = vsel %vm440, %v485, %v375
    %v506 = vsel %vm441, %v489, %v376
    %v507 = vsel %vm442, %v493, %v377
    %v508 = vmul.f32 %v12, %v495
    %v509 = vmul.f32 %v13, %v496
    %v510 = vmul.f32 %v14, %v497
    %v511 = vmul.f32 %v15, %v498
    %v512 = vmul.f32 %v16, %v499
    %v513 = vmul.f32 %v17, %v500
    %v514 = vmul.f32 %v18, %v501
    %v515 = vmul.f32 %v19, %v502
    %v516 = vmul.f32 %v20, %v503
    %v517 = vmul.f32 %v21, %v504
    %v518 = vmul.f32 %v22, %v505
    %v519 = vmul.f32 %v23, %v506
    %v520 = vmul.f32 %v24, %v507
    %521 = vst [vmem:[#allocation2] sm:$0xff] %v508
    %522 = vst [vmem:[#allocation2 + $0x8] sm:$0xff] %v509
    %523 = vst [vmem:[#allocation2 + $0x10] sm:$0xff] %v510
    %524 = vst [vmem:[#allocation2 + $0x18] sm:$0xff] %v511
    %525 = vst [vmem:[#allocation2 + $0x20] sm:$0xff] %v512
    %526 = vst [vmem:[#allocation2 + $0x28] sm:$0xff] %v513
    %527 = vst [vmem:[#allocation2 + $0x30] sm:$0xff] %v514
    %528 = vst [vmem:[#allocation2 + $0x38] sm:$0xff] %v515
    %529 = vst [vmem:[#allocation2 + $0x40] sm:$0xff] %v516
    %530 = vst [vmem:[#allocation2 + $0x48] sm:$0xff] %v517
    %531 = vst [vmem:[#allocation2 + $0x50] sm:$0xff] %v518
    %532 = vst [vmem:[#allocation2 + $0x58] sm:$0xff] %v519
    %533 = vst [vmem:[#allocation2 + $0x60] sm:$0x3] %v520
    // Predicated region
    $region10: #{tpu_custom_call.1} parent=1 // pred_check
      _
    $region11: #{tpu_custom_call.1} parent=1 // pred_check_branch
      %535 = sbr.rel (0) target = $region13
    $region12: #{tpu_custom_call.1} parent=1 // pred_region
      %s537 = ssub.s32 1664, 1664
      %538 = vsyncadd [#allocation3], %s537
      %s539 = sshll.u32 [#allocation2], 4
      %s540 = int_to_ptr.vmem [resolvable:$true] %s539
      %545 = dma.vmem_to_hbm [thread:$0]  %s540, 1664, %s2, [#allocation3], 128, 128, 8
    $region13: #{tpu_custom_call.1} parent=1 // pred_fallthru
      _
    // Predicated region
    $region14: #{tpu_custom_call.1} parent=1 // pred_check
      _
    $region15: #{tpu_custom_call.1} parent=1 // pred_check_branch
      %547 = sbr.rel (0) target = $region17
    $region16: #{tpu_custom_call.1} parent=1 // pred_region
      %548 = dma.done [#allocation3], 1664
    $region17: #{tpu_custom_call.1} parent=1 // pred_fallthru
      _
    %549 = vsyncpa [#allocation3], 1

</llo_original>
